<compile_context>
chip_gen: v6e
topology: v6e:2x2x1
jax: 0.10.0
libtpu: 0.0.40
codegen_flags: <defaults>
</compile_context>

<pallas_src>
import functools

import jax
import jax.numpy as jnp
from jax.experimental import pallas as pl
from jax.experimental.pallas import tpu as pltpu


def _cdiv(a, b):
    return -(-a // b)


def _round_up(a, b):
    return _cdiv(a, b) * b


def _int_pow(x, n):
    """x**n for a small static positive integer n using only VPU multiplies."""
    acc, base = None, x
    while n > 0:
        if n & 1:
            acc = base if acc is None else acc * base
        n >>= 1
        if n:
            base = base * base
    return acc


def _gem_kernel_learnable_p(p_ref, x_ref, o_ref, *, eps, inv_hw, elem_dtype):
    # p_ref: SMEM (1,) learnable exponent.  The pooling reduction is axis 1 in
    # both layouts:
    #   (rows, H*W)          -> lane reduce   (row layout)
    #   (batch, H*W, C_tile) -> sublane reduce (channels-on-lanes layout)
    p = p_ref[0]
    x = jnp.maximum(x_ref[...].astype(elem_dtype), eps)
    xp = jnp.exp(p.astype(elem_dtype) * jnp.log(x))           # clamp(x,eps)**p
    s = jnp.sum(xp.astype(jnp.float32), axis=1, keepdims=True) * inv_hw
    o_ref[...] = jnp.exp(jnp.log(s) * (1.0 / p)).astype(o_ref.dtype)


def _gem_kernel_static_p(x_ref, o_ref, *, p_int, eps, inv_hw):
    # Frozen integer p: clamp(x,eps)**p via VPU multiplies, no per-element EUP.
    x = jnp.maximum(x_ref[...].astype(jnp.float32), eps)
    xp = _int_pow(x, p_int)
    s = jnp.sum(xp, axis=1, keepdims=True) * inv_hw
    o_ref[...] = jnp.exp(jnp.log(s) * (1.0 / p_int)).astype(o_ref.dtype)


def gem_pallas(x, p, eps=1e-6, *,
               vmem_tile_bytes=12 * 1024 * 1024,
               vmem_limit_bytes=32 * 1024 * 1024,
               bf16_transcendentals=False):
    """GeM pooling.  x: (N, C, H, W).  p: learnable (1,) array, or a static
    Python scalar (integer p takes the transcendental-free VPU fast path).
    Returns (N, C, 1, 1) in x.dtype."""
    n, c, h, w = x.shape
    nc, hw = n * c, h * w
    itemsize = jnp.dtype(x.dtype).itemsize

    # Static integer-p fast path (e.g. frozen p=3): no per-element EUP ops.
    p_int = None
    if isinstance(p, (int, float)) and float(p) == int(p) and 1 <= int(p) <= 16:
        p_int = int(p)

    # Opt-in bf16 log/exp (v6e/v7x EUP ~2x faster; ~1e-3 rel err, inference
    # only). f32 accumulation either way. Keep False on v5e (no bf16 EUP/VPU)
    # and for tolerance-tight tests/training.
    elem_dtype = jnp.bfloat16 if bf16_transcendentals else jnp.float32

    # Channels-on-lanes layout for feature maps whose H*W is not lane-aligned
    # (7x7, 14x14): avoids the hw->128 lane-padding waste. Needs C % 128 == 0.
    use_nhwc = (hw % 128 != 0) and (c % 128 == 0) and \
               (hw * 128 * itemsize <= vmem_tile_bytes)

    if use_nhwc:
        # TODO(synk): the NHWC transpose is one extra XLA pass over x in HBM;
        # a strided in-kernel DMA gather could avoid it.
        x_in = jnp.transpose(x, (0, 2, 3, 1)).reshape(n, hw, c)
        ct = ((vmem_tile_bytes // max(1, hw * itemsize)) // 128) * 128
        ct = max(128, min(ct, c))
        bt = max(1, min(n, vmem_tile_bytes // max(1, hw * ct * itemsize)))
        if _cdiv(n, bt) * _cdiv(c, ct) < 2:          # give both v7x TCs work
            if c > 128:
                ct = _round_up(_cdiv(c, 2), 128)
            elif n > 1:
                bt = _cdiv(n, 2)
        grid = (_cdiv(n, bt), _cdiv(c, ct))
        tile_bytes = bt * hw * ct * itemsize
        x_idx = lambda i, j: (i, 0, j)
        if tile_bytes < 2 * 1024 * 1024 and grid[0] * grid[1] >= 4:
            x_spec = pl.BlockSpec((bt, hw, ct), x_idx,
                                  pipeline_mode=pl.Buffered(3))
        else:
            x_spec = pl.BlockSpec((bt, hw, ct), x_idx)
        out_spec = pl.BlockSpec((bt, 1, ct), lambda i, j: (i, 0, j))
        out_shape = jax.ShapeDtypeStruct((n, 1, c), x.dtype)
        dim_sem = ("parallel", "parallel")
    else:
        # Row layout: each row of (N*C, H*W) is one pooling plane; the H*W
        # reduction runs along lanes.  Correct for any hw (lane padding only
        # if hw % 128 != 0 and the NHWC path was not applicable).
        # TODO(synk): planes with H*W*itemsize > vmem_tile_bytes would need an
        # hw-tiled accumulator grid axis; GeM feature maps never get there.
        x_in = x.reshape(nc, hw)
        rb = vmem_tile_bytes // max(1, hw * itemsize)
        if nc > 8:                                   # give both v7x TCs work
            rb = min(rb, _round_up(_cdiv(nc, 2), 8))
        rb = min(rb, _round_up(nc, 8))
        rb = max(8, (rb // 8) * 8)
        grid = (_cdiv(nc, rb),)
        tile_bytes = rb * hw * itemsize
        x_idx = lambda i: (i, 0)
        if tile_bytes < 2 * 1024 * 1024 and grid[0] >= 4:
            x_spec = pl.BlockSpec((rb, hw), x_idx,
                                  pipeline_mode=pl.Buffered(3))
        else:
            x_spec = pl.BlockSpec((rb, hw), x_idx)
        out_spec = pl.BlockSpec((rb, 1), lambda i: (i, 0))
        out_shape = jax.ShapeDtypeStruct((nc, 1), x.dtype)
        dim_sem = ("parallel",)

    if p_int is not None:
        kernel = functools.partial(_gem_kernel_static_p, p_int=p_int,
                                   eps=float(eps), inv_hw=1.0 / float(hw))
        in_specs = [x_spec]
        args = (x_in,)
    else:
        p_arr = jnp.asarray(p, dtype=jnp.float32).reshape(1)
        kernel = functools.partial(_gem_kernel_learnable_p, eps=float(eps),
                                   inv_hw=1.0 / float(hw),
                                   elem_dtype=elem_dtype)
        in_specs = [pl.BlockSpec(memory_space=pltpu.SMEM), x_spec]
        args = (p_arr, x_in)

    out = pl.pallas_call(
        kernel,
        out_shape=out_shape,
        grid=grid,
        in_specs=in_specs,
        out_specs=out_spec,
        compiler_params=pltpu.CompilerParams(
            dimension_semantics=dim_sem,
            vmem_limit_bytes=vmem_limit_bytes),
    )(*args)

    return out.reshape(n, c, 1, 1)


def gem_ref(x, p, eps=1e-6):
    # pure-JAX reference mirroring the PyTorch module
    xp = jnp.power(jnp.maximum(x, eps), p[0])
    pooled = jnp.mean(xp, axis=(-2, -1), keepdims=True)
    return jnp.power(pooled, 1.0 / p[0])


if __name__ == "__main__":
    key = jax.random.PRNGKey(0)
    k0, k1 = jax.random.split(key)

    # small NCHW input consistent with the module; p = ones(1) * 3 (GeM init)
    x = jax.random.uniform(k0, (2, 4, 16, 16), dtype=jnp.float32)
    p = jnp.ones((1,), dtype=jnp.float32) * 3.0
    ref = gem_ref(x, p, eps=1e-6)

    # 1) learnable-p path (module semantics: p is a Parameter array)
    out = gem_pallas(x, p, eps=1e-6)
    jax.block_until_ready(out)
    assert out.shape == (2, 4, 1, 1), out.shape
    assert jnp.allclose(out, ref, atol=1e-5, rtol=1e-5)

    # 2) frozen integer-p fast path (VPU-only element math, no EUP)
    out_fast = gem_pallas(x, 3, eps=1e-6)
    jax.block_until_ready(out_fast)
    assert jnp.allclose(out_fast, ref, atol=1e-5, rtol=1e-5)

    # 3) channels-on-lanes path for a canonical 7x7 GeM feature map
    x2 = jax.random.uniform(k1, (2, 128, 7, 7), dtype=jnp.float32)
    out2 = gem_pallas(x2, p, eps=1e-6)
    jax.block_until_ready(out2)
    ref2 = gem_ref(x2, p, eps=1e-6)
    assert out2.shape == (2, 128, 1, 1), out2.shape
    assert jnp.allclose(out2, ref2, atol=1e-5, rtol=1e-5)

    print("KERNEL_OK")
</pallas_src>

<mosaic_0001>
module attributes {stable_mosaic.version = 11 : i64} {
  func.func @_gem_kernel_learnable_p(%arg0: i32, %arg1: memref<1xf32, #tpu.memory_space<smem>>, %arg2: memref<8x256xf32, #tpu.memory_space<vmem>>, %arg3: memref<8x1xf32, #tpu.memory_space<vmem>>) attributes {dimension_semantics = [#tpu.dimension_semantics<parallel>], iteration_bounds = array<i64: 1>, scalar_prefetch = 0 : i64, scratch_operands = 0 : i64, tpu.core_type = #tpu.core_type<tc>, window_params = [{transform_indices = @transform_0, window_bounds = array<i64: 1>}, {transform_indices = @transform_1, window_bounds = array<i64: 8, 256>}, {transform_indices = @transform_2, window_bounds = array<i64: 8, 1>}]} {
    %c0 = arith.constant 0 : index
    %0 = memref.load %arg1[%c0] : memref<1xf32, #tpu.memory_space<smem>>
    %c0_0 = arith.constant 0 : index
    %c0_1 = arith.constant 0 : index
    %1 = vector.load %arg2[%c0_0, %c0_1] : memref<8x256xf32, #tpu.memory_space<vmem>>, vector<8x256xf32>
    %cst = arith.constant 9.99999997E-7 : f32
    %2 = vector.broadcast %cst : f32 to vector<8x256xf32>
    %3 = arith.maximumf %1, %2 : vector<8x256xf32>
    %4 = math.log %3 : vector<8x256xf32>
    %5 = vector.broadcast %0 : f32 to vector<8x256xf32>
    %6 = arith.mulf %5, %4 : vector<8x256xf32>
    %7 = math.exp %6 : vector<8x256xf32>
    %cst_2 = arith.constant dense<0.000000e+00> : vector<8xf32>
    %8 = vector.multi_reduction <add>, %7, %cst_2 [1] : vector<8x256xf32> to vector<8xf32>
    %9 = vector.shape_cast %8 : vector<8xf32> to vector<8x1xf32>
    %cst_3 = arith.constant 3.906250e-03 : f32
    %10 = vector.broadcast %cst_3 : f32 to vector<8x1xf32>
    %11 = arith.mulf %9, %10 : vector<8x1xf32>
    %12 = math.log %11 : vector<8x1xf32>
    %cst_4 = arith.constant 1.000000e+00 : f32
    %13 = arith.divf %cst_4, %0 : f32
    %14 = vector.broadcast %13 : f32 to vector<8x1xf32>
    %15 = arith.mulf %12, %14 : vector<8x1xf32>
    %16 = math.exp %15 : vector<8x1xf32>
    %c0_5 = arith.constant 0 : index
    %c0_6 = arith.constant 0 : index
    %17 = vector.load %arg3[%c0_5, %c0_6] : memref<8x1xf32, #tpu.memory_space<vmem>>, vector<8x1xf32>
    tpu.vector_store %arg3[%c0_5, %c0_6], %16 {strides = array<i32>} : memref<8x1xf32, #tpu.memory_space<vmem>>, vector<8x1xf32>,
    return
  }
  func.func @transform_0(%arg0: i32) -> i32 {
    %c0_i32 = arith.constant 0 : i32
    %c0_i32_0 = arith.constant 0 : i32
    return %c0_i32 : i32
  }
  func.func @transform_1(%arg0: i32) -> (i32, i32) {
    %c0_i32 = arith.constant 0 : i32
    %c0_i32_0 = arith.constant 0 : i32
    return %arg0, %c0_i32 : i32, i32
  }
  func.func @transform_2(%arg0: i32) -> (i32, i32) {
    %c0_i32 = arith.constant 0 : i32
    %c0_i32_0 = arith.constant 0 : i32
    return %arg0, %c0_i32 : i32, i32
  }
}

</mosaic_0001>

<llo_original>
// kernel: tpu_custom_call.1
$region0: #{tpu_custom_call.1}
  #allocation0 [shape = 'u32[]', space=smem, size = 0x4, offset = 0x4, fixed_abs, tag = 'smem constant byte address 0x4 - core index']
  #allocation1 [shape = 'u32[144,128]{1,0:T(1,128)}', space=vmem, size = 0x12000, scoped, tag = 'internal scratch']
  #allocation2 [shape = 'f32[1]{0:T(128)S(6)}', space=smem, size = 0x200, scoped, tag = 'scoped memory for tpu_custom_call.1']
  %s0 = inlined_call_operand.<no memory space> [shape: f32[1], index: 0, kind: input, shape index: {}]
  %s1 = inlined_call_operand.hbm [shape: f32[8,256], index: 1, kind: input, shape index: {}]
  %s2 = inlined_call_operand.vmem [shape: f32[8,1], index: 2, kind: output, shape index: {}]
  %s3 = sld [smem:[#allocation0]]
  $region22: #{tpu_custom_call.1} parent=0
    _
  %s5 = ssub.s32 1, %s3
  %s6 = scalar_select 0, %s5, %s3
  %7 = sst [smem:[#allocation2]] %s0
  $region1: #{tpu_custom_call.1} parent=0
    #allocation3 [shape = 'u8[8192]{0}', space=vmem, size = 0x2000, scoped, tag = 'input window, operand 1, single buffered']
    #allocation4 [shape = 's32[1]{0}', space=sflag, size = 0x4, scoped, tag = 'scoped memory for tpu_custom_call.1']
    %8 = vsyncpa [#allocation4], 0
    // Predicated region
    $region2: #{tpu_custom_call.1} parent=1 // pred_check
      _
    $region3: #{tpu_custom_call.1} parent=1 // pred_check_branch
      %10 = sbr.rel (0) target = $region5
    $region4: #{tpu_custom_call.1} parent=1 // pred_region
      _
    $region5: #{tpu_custom_call.1} parent=1 // pred_fallthru
      _
    // Predicated region
    $region6: #{tpu_custom_call.1} parent=1 // pred_check
      _
    $region7: #{tpu_custom_call.1} parent=1 // pred_check_branch
      %12 = sbr.rel (0) target = $region9
    $region8: #{tpu_custom_call.1} parent=1 // pred_region
      %s14 = ssub.s32 256, 256
      %15 = vsyncadd [#allocation4], %s14
      %s17 = sshll.u32 [#allocation3], 4
      %s18 = int_to_ptr.vmem [resolvable:$true] %s17
      %20 = dma.hbm_to_vmem [thread:$0]  %s1, 256, %s18, [#allocation4]
    $region9: #{tpu_custom_call.1} parent=1 // pred_fallthru
      _
    // Predicated region
    $region10: #{tpu_custom_call.1} parent=1 // pred_check
      _
    $region11: #{tpu_custom_call.1} parent=1 // pred_check_branch
      %22 = sbr.rel (0) target = $region13
    $region12: #{tpu_custom_call.1} parent=1 // pred_region
      %23 = dma.done [#allocation4], 256
    $region13: #{tpu_custom_call.1} parent=1 // pred_fallthru
      _
    %s24 = sld [smem:[#allocation2]]
    %v25 = vld [vmem:[#allocation3] sm:$0xff]
    %v26 = vld [vmem:[#allocation3 + $0x8] sm:$0xff]
    %v27 = vmax.f32 %v25, 1e-06
    %v28 = vmax.f32 %v26, 1e-06
    %v29 = vlog2.pop %v27
    %v30 = vmul.f32 %v29, 0.6931472
    %v31 = vlog2.pop %v28
    %v32 = vmul.f32 %v31, 0.6931472
    %v33 = vstv %s24
    %v34 = vmul.f32 %v33, %v30
    %v35 = vmul.f32 %v33, %v32
    %v36 = vmul.f32 %v34, 1.442695
    %v37 = vpow.pop %v36
    %v38 = vmul.f32 %v35, 1.442695
    %v39 = vpow.pop %v38
    %v40 = vadd.f32 %v37, %v39
    %41 = vadd.xlane.f32.xlu0 %v40
    %v42 = vpop.xlane.xlu0 %41
    %v43 = vmul.f32 %v42, 0.00390625
    %v44 = vlog2.pop %v43
    %v45 = vmul.f32 %v44, 0.6931472
    %v46 = vstv %s24
    %v47 = vrcp.pop %v46
    %s48 = vtos %v47
    %v49 = vstv %s48
    %v50 = vmul.f32 %v45, %v49
    %v51 = vmul.f32 %v50, 1.442695
    %v52 = vpow.pop %v51
    %vm53 = vcmask 7168
    %54 = vst.msk [vmem:[%s2] sm:$0xff] %vm53, %v52
    // Predicated region
    $region14: #{tpu_custom_call.1} parent=1 // pred_check
      _
    $region15: #{tpu_custom_call.1} parent=1 // pred_check_branch
      %56 = sbr.rel (0) target = $region17
    $region16: #{tpu_custom_call.1} parent=1 // pred_region
      _
    $region17: #{tpu_custom_call.1} parent=1 // pred_fallthru
      _
    // Predicated region
    $region18: #{tpu_custom_call.1} parent=1 // pred_check
      _
    $region19: #{tpu_custom_call.1} parent=1 // pred_check_branch
      %58 = sbr.rel (0) target = $region21
    $region20: #{tpu_custom_call.1} parent=1 // pred_region
      _
    $region21: #{tpu_custom_call.1} parent=1 // pred_fallthru
      _
    %59 = vsyncpa [#allocation4], 1

</llo_original>
